<compile_context>
chip_gen: v6e
topology: v6e:2x2x1
jax: 0.10.0
libtpu: 0.0.40
codegen_flags: <defaults>
</compile_context>

<pallas_src>
import functools

import jax
import jax.numpy as jnp
from jax.experimental import pallas as pl
from jax.experimental.pallas import tpu as pltpu


def _pair(v):
    if isinstance(v, (tuple, list)):
        return tuple(v)
    return (v, v)


def _pick_channel_block(c):
    """Channel block: full C if it isn't 128-aligned, else a 128-multiple <= 512."""
    if c <= 0 or c % 128 != 0:
        return c
    cb = min(c, 512)
    while c % cb:
        cb -= 128
    return cb


def _maxpool_nhwc_kernel(x_ref, o_ref, *, kh, kw, sh, sw, dh, dw, oh, ow):
    """(Hp, Wp, Cb) zero-padded plane block -> (OH, OW, Cb) max-pooled block."""

    # --- W axis: fold window tap + output stride into strided sublane loads. ---
    def w_tap(j):
        start = j * dw
        if sw == 1:
            return x_ref[:, start:start + ow, :]
        return x_ref[:, pl.ds(start, ow, stride=sw), :]

    t = w_tap(0)                                    # (Hp, OW, Cb)
    for j in range(1, kw):
        t = jnp.maximum(t, w_tap(j))

    # --- H axis: stride-1 window max over unit-stride major-dim slices... ---
    h1 = oh * sh        # wrapper pads H so that Hp == oh*sh + dh*(kh-1)
    y = t[0:h1]
    for i in range(1, kh):
        y = jnp.maximum(y, t[i * dh:i * dh + h1])   # (oh*sh, OW, Cb)

    # --- ...then decimate rows with a free major-dim reshape + index. ---
    if sh == 1:
        out = y
    else:
        out = y.reshape(oh, sh, ow, y.shape[-1])[:, 0]

    o_ref[...] = out.astype(o_ref.dtype)


class MaxPool2dPallas:
    """Pallas port of the dafne MaxPool2d module (forward pass)."""

    def __init__(self, kernel_size, stride=None, padding=0, dilation=1,
                 return_indices=False, ceil_mode=False, padding_mode='static_same'):
        self.kernel_size = _pair(kernel_size)
        self.stride = _pair(stride) if stride is not None else self.kernel_size
        self.dilation = _pair(dilation)
        if return_indices:
            # TODO(synk): return_indices=True (argmax indices) not implemented.
            raise NotImplementedError("return_indices=True is not supported")
        if ceil_mode:
            # TODO(synk): ceil_mode=True not implemented (floor-mode output only).
            raise NotImplementedError("ceil_mode=True is not supported")

        if padding_mode == 'static_same':
            # Same formula as the PyTorch module (dim-0 kernel/stride for both dims).
            p = max(self.kernel_size[0] - self.stride[0], 0)
            # F.pad order: (w_left, w_right, h_top, h_bottom).
            self.pad4 = (p // 2, p - p // 2, p // 2, p - p // 2)
        elif padding_mode == 'dynamic_same':
            # Faithful to the reference module: padding=(0,0) -> no padding applied.
            self.pad4 = (0, 0, 0, 0)
        else:
            # Reference module: F.pad(input, _pair(padding)) pads only W.
            p = _pair(padding)
            self.pad4 = (p[0], p[1], 0, 0)

    def __call__(self, x):
        n, c, h, w = x.shape
        wl, wr, ht, hb = self.pad4
        kh, kw = self.kernel_size
        sh, sw = self.stride
        dh, dw = self.dilation

        hp = h + ht + hb
        wp = w + wl + wr
        oh = (hp - dh * (kh - 1) - 1) // sh + 1   # floor mode (ceil_mode=False)
        ow = (wp - dw * (kw - 1) - 1) // sw + 1
        if oh <= 0 or ow <= 0:
            raise ValueError("pooling window larger than (padded) input")

        # Extra zero rows at the bottom so the in-kernel H decimation can use a
        # free reshape; those rows are never selected by any output element.
        hp_k = oh * sh + dh * (kh - 1)
        extra_h = hp_k - hp

        # Layout plumbing: NCHW -> NHWC (+ zero pad). Plain XLA glue; it keeps
        # C on lanes inside the kernel so the output stores are lane-dense.
        # TODO(synk): fold the pad/transpose into the pallas_call input DMA
        # (allow_input_fusion) to save one HBM round-trip.
        x_nhwc = jnp.transpose(x, (0, 2, 3, 1))
        x_pad = jnp.pad(x_nhwc, ((0, 0), (ht, hb + extra_h), (wl, wr), (0, 0)))

        cb = _pick_channel_block(c)
        kernel = functools.partial(
            _maxpool_nhwc_kernel,
            kh=kh, kw=kw, sh=sh, sw=sw, dh=dh, dw=dw, oh=oh, ow=ow)

        out_nhwc = pl.pallas_call(
            kernel,
            out_shape=jax.ShapeDtypeStruct((n, oh, ow, c), x.dtype),
            grid=(n, c // cb),
            in_specs=[pl.BlockSpec((None, hp_k, wp, cb),
                                   lambda b, ci: (b, 0, 0, ci))],
            out_specs=pl.BlockSpec((None, oh, ow, cb),
                                   lambda b, ci: (b, 0, 0, ci)),
            compiler_params=pltpu.CompilerParams(
                dimension_semantics=("parallel", "parallel"),
                vmem_limit_bytes=64 * 1024 * 1024),
        )(x_pad)

        return jnp.transpose(out_nhwc, (0, 3, 1, 2))


if __name__ == "__main__":
    key = jax.random.PRNGKey(0)
    x = jax.random.normal(key, (2, 4, 16, 16), dtype=jnp.float32)

    # Config 1: backbone-stem style 3x3 maxpool, stride 2, 'static_same' padding.
    pool = MaxPool2dPallas(kernel_size=3, stride=2)
    out = jax.block_until_ready(pool(x))
    # Reference: zero-pad (0,1) on H and W (p=1 -> (0,1,0,1)), then VALID 3x3/s2 max.
    x_pad = jnp.pad(x, ((0, 0), (0, 0), (0, 1), (0, 1)))
    ref = jax.lax.reduce_window(x_pad, -jnp.inf, jax.lax.max,
                                (1, 1, 3, 3), (1, 1, 2, 2), 'VALID')
    assert out.shape == ref.shape == (2, 4, 8, 8), (out.shape, ref.shape)
    assert jnp.allclose(out, ref), "Pallas maxpool mismatch vs reference (3x3/s2)"

    # Config 2: 3x3, stride 1 ('static_same' -> pad (1,1,1,1)); exercises s==1 paths.
    pool1 = MaxPool2dPallas(kernel_size=3, stride=1)
    out1 = jax.block_until_ready(pool1(x))
    x_pad1 = jnp.pad(x, ((0, 0), (0, 0), (1, 1), (1, 1)))
    ref1 = jax.lax.reduce_window(x_pad1, -jnp.inf, jax.lax.max,
                                 (1, 1, 3, 3), (1, 1, 1, 1), 'VALID')
    assert out1.shape == ref1.shape == (2, 4, 16, 16), (out1.shape, ref1.shape)
    assert jnp.allclose(out1, ref1), "Pallas maxpool mismatch vs reference (3x3/s1)"

    print("KERNEL_OK")
</pallas_src>

<mosaic_0001>
module attributes {stable_mosaic.version = 11 : i64} {
  func.func @_maxpool_nhwc_kernel(%arg0: i32, %arg1: i32, %arg2: memref<1x18x17x4xf32, #tpu.memory_space<vmem>>, %arg3: memref<1x8x8x4xf32, #tpu.memory_space<vmem>>) attributes {dimension_semantics = [#tpu.dimension_semantics<parallel>, #tpu.dimension_semantics<parallel>], iteration_bounds = array<i64: 2, 1>, scalar_prefetch = 0 : i64, scratch_operands = 0 : i64, tpu.core_type = #tpu.core_type<tc>, window_params = [{transform_indices = @transform_0, window_bounds = array<i64: 1, 18, 17, 4>}, {transform_indices = @transform_1, window_bounds = array<i64: 1, 8, 8, 4>}]} {
    %c0 = arith.constant 0 : index
    %c0_0 = arith.constant 0 : index
    %c0_1 = arith.constant 0 : index
    %c0_2 = arith.constant 0 : index
    %0 = tpu.strided_load %arg2[%c0, %c0_0, %c0_1, %c0_2] {strides = array<i32: 1, 1, 2, 1>} : memref<1x18x17x4xf32, #tpu.memory_space<vmem>>, vector<1x18x8x4xf32>
    %1 = vector.shape_cast %0 : vector<1x18x8x4xf32> to vector<18x8x4xf32>
    %c0_3 = arith.constant 0 : index
    %c0_4 = arith.constant 0 : index
    %c1 = arith.constant 1 : index
    %c0_5 = arith.constant 0 : index
    %2 = tpu.strided_load %arg2[%c0_3, %c0_4, %c1, %c0_5] {strides = array<i32: 1, 1, 2, 1>} : memref<1x18x17x4xf32, #tpu.memory_space<vmem>>, vector<1x18x8x4xf32>
    %3 = vector.shape_cast %2 : vector<1x18x8x4xf32> to vector<18x8x4xf32>
    %4 = arith.maximumf %1, %3 : vector<18x8x4xf32>
    %c0_6 = arith.constant 0 : index
    %c0_7 = arith.constant 0 : index
    %c2 = arith.constant 2 : index
    %c0_8 = arith.constant 0 : index
    %5 = tpu.strided_load %arg2[%c0_6, %c0_7, %c2, %c0_8] {strides = array<i32: 1, 1, 2, 1>} : memref<1x18x17x4xf32, #tpu.memory_space<vmem>>, vector<1x18x8x4xf32>
    %6 = vector.shape_cast %5 : vector<1x18x8x4xf32> to vector<18x8x4xf32>
    %7 = arith.maximumf %4, %6 : vector<18x8x4xf32>
    %8 = vector.extract_strided_slice %7 {offsets = [0, 0, 0], sizes = [16, 8, 4], strides = [1, 1, 1]} : vector<18x8x4xf32> to vector<16x8x4xf32>
    %9 = vector.extract_strided_slice %7 {offsets = [1, 0, 0], sizes = [16, 8, 4], strides = [1, 1, 1]} : vector<18x8x4xf32> to vector<16x8x4xf32>
    %10 = arith.maximumf %8, %9 : vector<16x8x4xf32>
    %11 = vector.extract_strided_slice %7 {offsets = [2, 0, 0], sizes = [16, 8, 4], strides = [1, 1, 1]} : vector<18x8x4xf32> to vector<16x8x4xf32>
    %12 = arith.maximumf %10, %11 : vector<16x8x4xf32>
    %13 = vector.shape_cast %12 : vector<16x8x4xf32> to vector<8x2x8x4xf32>
    %14 = vector.extract_strided_slice %13 {offsets = [0, 0, 0, 0], sizes = [8, 1, 8, 4], strides = [1, 1, 1, 1]} : vector<8x2x8x4xf32> to vector<8x1x8x4xf32>
    %15 = vector.shape_cast %14 : vector<8x1x8x4xf32> to vector<8x8x4xf32>
    %c0_9 = arith.constant 0 : index
    %c0_10 = arith.constant 0 : index
    %c0_11 = arith.constant 0 : index
    %c0_12 = arith.constant 0 : index
    %16 = vector.load %arg3[%c0_9, %c0_10, %c0_11, %c0_12] : memref<1x8x8x4xf32, #tpu.memory_space<vmem>>, vector<1x8x8x4xf32>
    %17 = vector.shape_cast %16 : vector<1x8x8x4xf32> to vector<8x8x4xf32>
    %18 = vector.shape_cast %15 : vector<8x8x4xf32> to vector<1x8x8x4xf32>
    tpu.vector_store %arg3[%c0_9, %c0_10, %c0_11, %c0_12], %18 {strides = array<i32>} : memref<1x8x8x4xf32, #tpu.memory_space<vmem>>, vector<1x8x8x4xf32>,
    return
  }
  func.func @transform_0(%arg0: i32, %arg1: i32) -> (i32, i32, i32, i32) {
    %c0_i32 = arith.constant 0 : i32
    %c0_i32_0 = arith.constant 0 : i32
    %c0_i32_1 = arith.constant 0 : i32
    return %arg0, %c0_i32, %c0_i32_0, %arg1 : i32, i32, i32, i32
  }
  func.func @transform_1(%arg0: i32, %arg1: i32) -> (i32, i32, i32, i32) {
    %c0_i32 = arith.constant 0 : i32
    %c0_i32_0 = arith.constant 0 : i32
    %c0_i32_1 = arith.constant 0 : i32
    return %arg0, %c0_i32, %c0_i32_0, %arg1 : i32, i32, i32, i32
  }
}

</mosaic_0001>

<llo_original>
// kernel: tpu_custom_call.1
$region0: #{tpu_custom_call.1}
  #allocation0 [shape = 'u32[]', space=smem, size = 0x4, offset = 0x4, fixed_abs, tag = 'smem constant byte address 0x4 - core index']
  #allocation1 [shape = 'u32[144,128]{1,0:T(1,128)}', space=vmem, size = 0x12000, scoped, tag = 'internal scratch']
  %s0 = inlined_call_operand.vmem [shape: f32[2,18,17,4], index: 0, kind: input, shape index: {}]
  %s1 = inlined_call_operand.vmem [shape: f32[2,8,8,4], index: 1, kind: output, shape index: {}]
  %s2 = sld [smem:[#allocation0]]
  $region37: #{tpu_custom_call.1} parent=0
    _
  %s4 = ssub.s32 1, %s2
  %s5 = scalar_select 0, %s4, %s2
  loop: start=0, step=1, limit=4
  $region2: #{tpu_custom_call.1} parent=0 // loop_pre_header
    _
  $region3: #{tpu_custom_call.1} parent=0 // loop_header
    %s7 = sphi 0, %s11
    %p8 = scmp.ge.s32.totalorder %s7, 4
    %s14 = sphi 0, %s26
    %s15 = sphi 0, %s22
    %s16 = sphi 0, %s14
    %s17 = sphi 0, %s15
    %s18 = sphi 0, %s16
    %s19 = sphi 0, %s17
    %s31 = sphi 0, %s33
    %s34 = sphi 0, %s31
    %s35 = sphi 0, %s34
    %s51 = sphi 0, %s35
    %s59 = sphi 0, %s61
    %s62 = sphi 0, %s59
    %s63 = sphi 0, %s62
    %s79 = sphi 0, %s63
  $region4: #{tpu_custom_call.1} parent=0 // loop_header_branch
    %10 = sbr.rel (%p8) target = $region8
  $region5: #{tpu_custom_call.1} parent=0 // loop_body
    %s12 = ssub.s32 %s7, 1
    %s13 = ssub.s32 %s7, 2
    %s20 = sadd.s32 1, %s15
    %p21 = scmp.ge.s32.totalorder %s20, 1
    %s22 = scalar_select %p21, 0, %s20
    %s23 = sadd.s32 1, %s14
    %s24 = scalar_select %p21, %s23, %s14
    %p25 = scmp.ge.s32.totalorder %s24, 2
    %s26 = scalar_select %p25, 0, %s24
    %s27 = ssub.s32 %s14, %s26
    %s28 = ssub.s32 %s15, %s22
    %s29 = sor.u32 %s27, %s28
    %p30 = scmp.eq.s32.totalorder %s29, 0
    %s32 = sadd.s32 %s31, 1
    %s33 = scalar_select %p30, %s31, %s32
    %p36 = pneg %p30
    %p37 = scmp.eq.s32.totalorder %s7, 1
    %p38 = por %p36, %p37
    %p39 = scmp.ne.s32.totalorder %s31, %s34
    %p40 = scmp.eq.s32.totalorder %s7, 0
    %p41 = por %p39, %p40
    %p42 = scmp.ne.s32.totalorder %s31, %s34
    %p43 = scmp.eq.s32.totalorder %s12, 1
    %p44 = por %p42, %p43
    %p45 = scmp.ne.s32.totalorder %s34, %s35
    %p46 = scmp.eq.s32.totalorder %s12, 0
    %p47 = por %p45, %p46
    %p48 = scmp.ne.s32.totalorder %s34, %s35
    %p49 = scmp.eq.s32.totalorder %s13, 1
    %p50 = por %p48, %p49
    %p52 = scmp.ne.s32.totalorder %s35, %s51
    %p53 = scmp.eq.s32.totalorder %s13, 0
    %p54 = por %p52, %p53
    %s55 = ssub.s32 %s14, %s26
    %s56 = ssub.s32 %s15, %s22
    %s57 = sor.u32 %s55, %s56
    %p58 = scmp.eq.s32.totalorder %s57, 0
    %s60 = sadd.s32 %s59, 1
    %s61 = scalar_select %p58, %s59, %s60
    %p64 = pneg %p58
    %p65 = scmp.eq.s32.totalorder %s7, 1
    %p66 = por %p64, %p65
    %p67 = scmp.ne.s32.totalorder %s59, %s62
    %p68 = scmp.eq.s32.totalorder %s7, 0
    %p69 = por %p67, %p68
    %p70 = scmp.ne.s32.totalorder %s59, %s62
    %p71 = scmp.eq.s32.totalorder %s12, 1
    %p72 = por %p70, %p71
    %p73 = scmp.ne.s32.totalorder %s62, %s63
    %p74 = scmp.eq.s32.totalorder %s12, 0
    %p75 = por %p73, %p74
    %p76 = scmp.ne.s32.totalorder %s62, %s63
    %p77 = scmp.eq.s32.totalorder %s13, 1
    %p78 = por %p76, %p77
    %p80 = scmp.ne.s32.totalorder %s63, %s79
    %p81 = scmp.eq.s32.totalorder %s13, 0
    %p82 = por %p80, %p81
    %p83 = scmp.le.s32.totalorder 1, %s7
    %p84 = scmp.lt.s32.totalorder %s7, 3
    %p85 = pnand %p83, %p84
    %p86 = pneg %p85
    // Predicated region
    $region9: #{tpu_custom_call.1} parent=5 // pred_check
      _
    $region10: #{tpu_custom_call.1} parent=5 // pred_check_branch
      %88 = sbr.rel (%p85) target = $region12
    $region11: #{tpu_custom_call.1} parent=5 // pred_region
      %s89 = ssub.s32 %s7, 1
    $region12: #{tpu_custom_call.1} parent=5 // pred_fallthru
      _
    %p90 = scmp.lt.s32.totalorder %s7, 2
    // Predicated region
    $region13: #{tpu_custom_call.1} parent=5 // pred_check
      %p91 = pneg %p90
    $region14: #{tpu_custom_call.1} parent=5 // pred_check_branch
      %93 = sbr.rel (%p91) target = $region16
    $region15: #{tpu_custom_call.1} parent=5 // pred_region
      // Predicated region
      $region17: #{tpu_custom_call.1} parent=15 // pred_check
        %p94 = pneg %p41
      $region18: #{tpu_custom_call.1} parent=15 // pred_check_branch
        %96 = sbr.rel (%p94) target = $region20
      $region19: #{tpu_custom_call.1} parent=15 // pred_region
        %p97 = scmp.lt.s32.totalorder %s14, 1
        %s98 = scalar_select %p97, %s14, 1
        %p99 = scmp.lt.s32.totalorder %s15, 0
        %s100 = scalar_select %p99, %s15, 0
        %s101 = smul.addr %s98, 54
        %s102 = sadd.s32 %s100, %s101
        %s103 = smul.addr %s102, 8
        %s104 = scalar_lea.vmem %s0, %s103
      $region20: #{tpu_custom_call.1} parent=15 // pred_fallthru
        _
    $region16: #{tpu_custom_call.1} parent=5 // pred_fallthru
      _
    %p105 = scmp.le.s32.totalorder 1, %s7
    %p106 = scmp.lt.s32.totalorder %s7, 3
    %p107 = pnand %p105, %p106
    %p108 = pneg %p107
    // Predicated region
    $region21: #{tpu_custom_call.1} parent=5 // pred_check
      _
    $region22: #{tpu_custom_call.1} parent=5 // pred_check_branch
      %110 = sbr.rel (%p107) target = $region24
    $region23: #{tpu_custom_call.1} parent=5 // pred_region
      %s111 = ssub.s32 %s7, 1
      %p112 = scmp.lt.s32.totalorder %s16, 1
      %s113 = scalar_select %p112, %s16, 1
      %p114 = scmp.lt.s32.totalorder %s17, 0
      %s115 = scalar_select %p114, %s17, 0
      %s116 = smul.addr %s113, 54
      %s117 = sadd.s32 %s115, %s116
      %s118 = smul.addr %s117, 8
      %s119 = scalar_lea.vmem %s0, %s118
      %p120 = pneg %p47
      %p121 = pneg %p44
      %p122 = pneg %p75
      %p123 = pneg %p72
      %p124 = scmp.lt.s32.totalorder %s16, 1
      %s125 = scalar_select %p124, %s16, 1
      %p126 = scmp.lt.s32.totalorder %s17, 0
      %s127 = scalar_select %p126, %s17, 0
      %s128 = smul.addr %s125, 8
      %s129 = sadd.s32 %s127, %s128
      %s130 = smul.addr %s129, 8
      %s131 = scalar_lea.vmem %s1, %s130
      %p132 = scmp.lt.s32.totalorder %s16, 1
      %s133 = scalar_select %p132, %s16, 1
      %p134 = scmp.lt.s32.totalorder %s17, 0
      %s135 = scalar_select %p134, %s17, 0
      %s136 = smul.addr %s133, 54
      %s137 = sadd.s32 %s135, %s136
      %s138 = smul.addr %s137, 8
      %s139 = scalar_lea.vmem %s0, %s138
      %p140 = scmp.lt.s32.totalorder %s16, 1
      %s141 = scalar_select %p140, %s16, 1
      %p142 = scmp.lt.s32.totalorder %s17, 0
      %s143 = scalar_select %p142, %s17, 0
      %s144 = smul.addr %s141, 8
      %s145 = sadd.s32 %s143, %s144
      %s146 = smul.addr %s145, 8
      %s147 = scalar_lea.vmem %s1, %s146
      %v148 = vld [vmem:[%s139] ss:$2 sm:$0xff]
      %s149 = scalar_lea.vmem %s139, 24
      %v150 = vld [vmem:[%s149] ss:$2 sm:$0xff]
      %s151 = scalar_lea.vmem %s139, 48
      %v152 = vld [vmem:[%s151] ss:$2 sm:$0xff]
      %s153 = scalar_lea.vmem %s139, 72
      %v154 = vld [vmem:[%s153] ss:$2 sm:$0xff]
      %s155 = scalar_lea.vmem %s139, 96
      %v156 = vld [vmem:[%s155] ss:$2 sm:$0xff]
      %s157 = scalar_lea.vmem %s139, 120
      %v158 = vld [vmem:[%s157] ss:$2 sm:$0xff]
      %s159 = scalar_lea.vmem %s139, 144
      %v160 = vld [vmem:[%s159] ss:$2 sm:$0xff]
      %s161 = scalar_lea.vmem %s139, 168
      %v162 = vld [vmem:[%s161] ss:$2 sm:$0xff]
      %s163 = scalar_lea.vmem %s139, 192
      %v164 = vld [vmem:[%s163] ss:$2 sm:$0xff]
      %s165 = scalar_lea.vmem %s139, 216
      %v166 = vld [vmem:[%s165] ss:$2 sm:$0xff]
      %s167 = scalar_lea.vmem %s139, 240
      %v168 = vld [vmem:[%s167] ss:$2 sm:$0xff]
      %s169 = scalar_lea.vmem %s139, 264
      %v170 = vld [vmem:[%s169] ss:$2 sm:$0xff]
      %s171 = scalar_lea.vmem %s139, 288
      %v172 = vld [vmem:[%s171] ss:$2 sm:$0xff]
      %s173 = scalar_lea.vmem %s139, 312
      %v174 = vld [vmem:[%s173] ss:$2 sm:$0xff]
      %s175 = scalar_lea.vmem %s139, 336
      %v176 = vld [vmem:[%s175] ss:$2 sm:$0xff]
      %s177 = scalar_lea.vmem %s139, 360
      %v178 = vld [vmem:[%s177] ss:$2 sm:$0xff]
      %s179 = scalar_lea.vmem %s139, 384
      %v180 = vld [vmem:[%s179] ss:$2 sm:$0xff]
      %s181 = scalar_lea.vmem %s139, 1
      %v182 = vld [vmem:[%s181] ss:$2 sm:$0xff]
      %s183 = scalar_lea.vmem %s139, 25
      %v184 = vld [vmem:[%s183] ss:$2 sm:$0xff]
      %s185 = scalar_lea.vmem %s139, 49
      %v186 = vld [vmem:[%s185] ss:$2 sm:$0xff]
      %s187 = scalar_lea.vmem %s139, 73
      %v188 = vld [vmem:[%s187] ss:$2 sm:$0xff]
      %s189 = scalar_lea.vmem %s139, 97
      %v190 = vld [vmem:[%s189] ss:$2 sm:$0xff]
      %s191 = scalar_lea.vmem %s139, 121
      %v192 = vld [vmem:[%s191] ss:$2 sm:$0xff]
      %s193 = scalar_lea.vmem %s139, 145
      %v194 = vld [vmem:[%s193] ss:$2 sm:$0xff]
      %s195 = scalar_lea.vmem %s139, 169
      %v196 = vld [vmem:[%s195] ss:$2 sm:$0xff]
      %s197 = scalar_lea.vmem %s139, 193
      %v198 = vld [vmem:[%s197] ss:$2 sm:$0xff]
      %s199 = scalar_lea.vmem %s139, 217
      %v200 = vld [vmem:[%s199] ss:$2 sm:$0xff]
      %s201 = scalar_lea.vmem %s139, 241
      %v202 = vld [vmem:[%s201] ss:$2 sm:$0xff]
      %s203 = scalar_lea.vmem %s139, 265
      %v204 = vld [vmem:[%s203] ss:$2 sm:$0xff]
      %s205 = scalar_lea.vmem %s139, 289
      %v206 = vld [vmem:[%s205] ss:$2 sm:$0xff]
      %s207 = scalar_lea.vmem %s139, 313
      %v208 = vld [vmem:[%s207] ss:$2 sm:$0xff]
      %s209 = scalar_lea.vmem %s139, 337
      %v210 = vld [vmem:[%s209] ss:$2 sm:$0xff]
      %s211 = scalar_lea.vmem %s139, 361
      %v212 = vld [vmem:[%s211] ss:$2 sm:$0xff]
      %s213 = scalar_lea.vmem %s139, 385
      %v214 = vld [vmem:[%s213] ss:$2 sm:$0xff]
      %v215 = vmax.f32 %v148, %v182
      %v216 = vmax.f32 %v150, %v184
      %v217 = vmax.f32 %v152, %v186
      %v218 = vmax.f32 %v154, %v188
      %v219 = vmax.f32 %v156, %v190
      %v220 = vmax.f32 %v158, %v192
      %v221 = vmax.f32 %v160, %v194
      %v222 = vmax.f32 %v162, %v196
      %v223 = vmax.f32 %v164, %v198
      %v224 = vmax.f32 %v166, %v200
      %v225 = vmax.f32 %v168, %v202
      %v226 = vmax.f32 %v170, %v204
      %v227 = vmax.f32 %v172, %v206
      %v228 = vmax.f32 %v174, %v208
      %v229 = vmax.f32 %v176, %v210
      %v230 = vmax.f32 %v178, %v212
      %v231 = vmax.f32 %v180, %v214
      %s232 = scalar_lea.vmem %s139, 2
      %v233 = vld [vmem:[%s232] ss:$2 sm:$0xff]
      %s234 = scalar_lea.vmem %s139, 26
      %v235 = vld [vmem:[%s234] ss:$2 sm:$0xff]
      %s236 = scalar_lea.vmem %s139, 50
      %v237 = vld [vmem:[%s236] ss:$2 sm:$0xff]
      %s238 = scalar_lea.vmem %s139, 74
      %v239 = vld [vmem:[%s238] ss:$2 sm:$0xff]
      %s240 = scalar_lea.vmem %s139, 98
      %v241 = vld [vmem:[%s240] ss:$2 sm:$0xff]
      %s242 = scalar_lea.vmem %s139, 122
      %v243 = vld [vmem:[%s242] ss:$2 sm:$0xff]
      %s244 = scalar_lea.vmem %s139, 146
      %v245 = vld [vmem:[%s244] ss:$2 sm:$0xff]
      %s246 = scalar_lea.vmem %s139, 170
      %v247 = vld [vmem:[%s246] ss:$2 sm:$0xff]
      %s248 = scalar_lea.vmem %s139, 194
      %v249 = vld [vmem:[%s248] ss:$2 sm:$0xff]
      %s250 = scalar_lea.vmem %s139, 218
      %v251 = vld [vmem:[%s250] ss:$2 sm:$0xff]
      %s252 = scalar_lea.vmem %s139, 242
      %v253 = vld [vmem:[%s252] ss:$2 sm:$0xff]
      %s254 = scalar_lea.vmem %s139, 266
      %v255 = vld [vmem:[%s254] ss:$2 sm:$0xff]
      %s256 = scalar_lea.vmem %s139, 290
      %v257 = vld [vmem:[%s256] ss:$2 sm:$0xff]
      %s258 = scalar_lea.vmem %s139, 314
      %v259 = vld [vmem:[%s258] ss:$2 sm:$0xff]
      %s260 = scalar_lea.vmem %s139, 338
      %v261 = vld [vmem:[%s260] ss:$2 sm:$0xff]
      %s262 = scalar_lea.vmem %s139, 362
      %v263 = vld [vmem:[%s262] ss:$2 sm:$0xff]
      %s264 = scalar_lea.vmem %s139, 386
      %v265 = vld [vmem:[%s264] ss:$2 sm:$0xff]
      %v266 = vmax.f32 %v215, %v233
      %v267 = vmax.f32 %v216, %v235
      %v268 = vmax.f32 %v217, %v237
      %v269 = vmax.f32 %v218, %v239
      %v270 = vmax.f32 %v219, %v241
      %v271 = vmax.f32 %v220, %v243
      %v272 = vmax.f32 %v221, %v245
      %v273 = vmax.f32 %v222, %v247
      %v274 = vmax.f32 %v223, %v249
      %v275 = vmax.f32 %v224, %v251
      %v276 = vmax.f32 %v225, %v253
      %v277 = vmax.f32 %v226, %v255
      %v278 = vmax.f32 %v227, %v257
      %v279 = vmax.f32 %v228, %v259
      %v280 = vmax.f32 %v229, %v261
      %v281 = vmax.f32 %v230, %v263
      %v282 = vmax.f32 %v231, %v265
      %v283 = vmax.f32 %v266, %v267
      %v284 = vmax.f32 %v268, %v269
      %v285 = vmax.f32 %v270, %v271
      %v286 = vmax.f32 %v272, %v273
      %v287 = vmax.f32 %v274, %v275
      %v288 = vmax.f32 %v276, %v277
      %v289 = vmax.f32 %v278, %v279
      %v290 = vmax.f32 %v280, %v281
      %v291 = vmax.f32 %v283, %v268
      %v292 = vmax.f32 %v284, %v270
      %v293 = vmax.f32 %v285, %v272
      %v294 = vmax.f32 %v286, %v274
      %v295 = vmax.f32 %v287, %v276
      %v296 = vmax.f32 %v288, %v278
      %v297 = vmax.f32 %v289, %v280
      %v298 = vmax.f32 %v290, %v282
      %vm299 = vcmask 31744
      %300 = vst.msk [vmem:[%s147] sm:$0xff] %vm299, %v291
      %301 = vst.msk [vmem:[%s147 + $0x8] sm:$0xff] %vm299, %v292
      %302 = vst.msk [vmem:[%s147 + $0x10] sm:$0xff] %vm299, %v293
      %303 = vst.msk [vmem:[%s147 + $0x18] sm:$0xff] %vm299, %v294
      %304 = vst.msk [vmem:[%s147 + $0x20] sm:$0xff] %vm299, %v295
      %305 = vst.msk [vmem:[%s147 + $0x28] sm:$0xff] %vm299, %v296
      %306 = vst.msk [vmem:[%s147 + $0x30] sm:$0xff] %vm299, %v297
      %307 = vst.msk [vmem:[%s147 + $0x38] sm:$0xff] %vm299, %v298
      %p308 = scmp.lt.s32.totalorder %s16, 1
      %s309 = scalar_select %p308, %s16, 1
      %p310 = scmp.lt.s32.totalorder %s17, 0
      %s311 = scalar_select %p310, %s17, 0
      %s312 = smul.addr %s309, 8
      %s313 = sadd.s32 %s311, %s312
      %s314 = smul.addr %s313, 8
      %s315 = scalar_lea.vmem %s1, %s314
      // Predicated region
      $region25: #{tpu_custom_call.1} parent=23 // pred_check
        %p316 = pneg %p72
      $region26: #{tpu_custom_call.1} parent=23 // pred_check_branch
        %318 = sbr.rel (%p316) target = $region28
      $region27: #{tpu_custom_call.1} parent=23 // pred_region
        _
      $region28: #{tpu_custom_call.1} parent=23 // pred_fallthru
        _
    $region24: #{tpu_custom_call.1} parent=5 // pred_fallthru
      _
    %p319 = scmp.le.s32.totalorder 2, %s7
    // Predicated region
    $region29: #{tpu_custom_call.1} parent=5 // pred_check
      %p320 = pneg %p319
    $region30: #{tpu_custom_call.1} parent=5 // pred_check_branch
      %322 = sbr.rel (%p320) target = $region32
    $region31: #{tpu_custom_call.1} parent=5 // pred_region
      %s323 = ssub.s32 %s7, 2
      // Predicated region
      $region33: #{tpu_custom_call.1} parent=31 // pred_check
        %p324 = pneg %p78
      $region34: #{tpu_custom_call.1} parent=31 // pred_check_branch
        %326 = sbr.rel (%p324) target = $region36
      $region35: #{tpu_custom_call.1} parent=31 // pred_region
        %p327 = scmp.lt.s32.totalorder %s18, 1
        %s328 = scalar_select %p327, %s18, 1
        %p329 = scmp.lt.s32.totalorder %s19, 0
        %s330 = scalar_select %p329, %s19, 0
        %s331 = smul.addr %s328, 8
        %s332 = sadd.s32 %s330, %s331
        %s333 = smul.addr %s332, 8
        %s334 = scalar_lea.vmem %s1, %s333
      $region36: #{tpu_custom_call.1} parent=31 // pred_fallthru
        _
    $region32: #{tpu_custom_call.1} parent=5 // pred_fallthru
      _
  $region6: #{tpu_custom_call.1} parent=0 // loop_footer
    %s11 = sadd.s32 1, %s7
  $region7: #{tpu_custom_call.1} parent=0 // loop_footer_branch
    %6 = sbr.rel target = $region3
  $region8: #{tpu_custom_call.1} parent=0 // loop_exit
    _

</llo_original>
